<compile_context>
chip_gen: v6e
topology: v6e:2x2x1
jax: 0.10.0
libtpu: 0.0.40
codegen_flags: <defaults>
</compile_context>

<pallas_src>
import jax
import jax.numpy as jnp
from jax.experimental import pallas as pl
from jax.experimental.pallas import tpu as pltpu


# ----------------------------------------------------------------------------
# Kernel
# ----------------------------------------------------------------------------
def _residual_conv_kernel(x_ref, wt_ref, b_ref, o_ref):
    """One (batch-block, L-tile) step of the 1x1-conv-as-GEMM.

    x_ref : (b_blk, C_in, L_tile)   activation tile (lane axis = spatial L)
    wt_ref: (C_out, C_in)           full weight, VMEM-resident across the grid
    b_ref : (C_out, 1)              bias column (f32), broadcast across lanes
    o_ref : (b_blk, C_out, L_tile)  lane-dense output tile
    """
    w = wt_ref[...]          # hoisted: loaded once per grid step
    bias = b_ref[...]        # (C_out, 1) f32
    # b_blk is a small static constant (<= 8): unrolled per-batch MXU matmuls.
    for bb in range(x_ref.shape[0]):
        acc = jnp.dot(w, x_ref[bb], preferred_element_type=jnp.float32)
        o_ref[bb] = (acc + bias).astype(o_ref.dtype)


# ----------------------------------------------------------------------------
# Tile selection (per-generation VMEM budget)
# ----------------------------------------------------------------------------
def _vmem_budget_bytes():
    """Per-generation VMEM limit + tile budget (double-buffered act in+out)."""
    try:
        cap = int(pltpu.get_tpu_info().vmem_capacity_bytes)
    except Exception:  # interpret mode / attribute differences: be conservative
        cap = 64 * 1024 * 1024
    vmem_limit = min((cap * 3) // 4, 96 * 1024 * 1024)   # 48 MiB on v7x, 96 MiB on v5e/v6e
    tile_budget = vmem_limit // 2
    return vmem_limit, tile_budget


def _choose_tiles(B, c_in, c_out, L, itemsize, l_tile_req, tile_budget,
                  max_b_blk=8):
    """Pick (b_blk, l_tile) so double-buffered in+out tiles fit the budget."""
    # bytes per lane column per batch row, double-buffered input + output
    per_col = 2 * (c_in + c_out) * itemsize
    # largest lane tile the budget allows with b_blk = 1, floored to 128
    max_cols = max(128, (tile_budget // per_col // 128) * 128)
    # round the requested tile to a multiple of 128 (avoids masked vst cliff)
    l_tile = max(128, (min(int(l_tile_req), max_cols) // 128) * 128)
    if l_tile >= L:
        l_tile = L                      # full-extent block: always legal
    # fold batches into the block until the budget (or B, or unroll cap) hits
    b_blk = int(max(1, min(B, max_b_blk, tile_budget // (per_col * max(l_tile, 1)))))
    return b_blk, l_tile


# ----------------------------------------------------------------------------
# Pallas wrapper: (B, C_in, L) x (C_out, C_in) -> (B, C_out, L)
# ----------------------------------------------------------------------------
def _pallas_pointwise_conv(x3d: jax.Array, wt: jax.Array, b: jax.Array,
                           l_tile: int = 8192) -> jax.Array:
    B, c_in, L = x3d.shape
    c_out = wt.shape[0]
    itemsize = jnp.dtype(x3d.dtype).itemsize

    # Deliberate: the matmul operands run in the activation dtype (bf16 stays
    # bf16 for 2x activation bandwidth); accumulation is always f32 and the
    # bias add happens on the f32 accumulator.  For f32 pipelines this is a
    # no-op (no silent downcast).
    wt = wt.astype(x3d.dtype)

    vmem_limit, tile_budget = _vmem_budget_bytes()
    b_blk, l_tile = _choose_tiles(B, c_in, c_out, L, itemsize, l_tile,
                                  tile_budget)

    grid_b = pl.cdiv(B, b_blk)
    grid_l = pl.cdiv(L, l_tile)

    return pl.pallas_call(
        _residual_conv_kernel,
        out_shape=jax.ShapeDtypeStruct((B, c_out, L), x3d.dtype),
        grid_spec=pltpu.PrefetchScalarGridSpec(
            num_scalar_prefetch=0,
            grid=(grid_b, grid_l),
            in_specs=[
                # activation tile: (b_blk, C_in, l_tile)
                pl.BlockSpec((b_blk, c_in, l_tile), lambda bi, li: (bi, 0, li)),
                # full weight, constant index -> stays resident in VMEM
                pl.BlockSpec((c_out, c_in), lambda bi, li: (0, 0)),
                # bias column, constant index
                pl.BlockSpec((c_out, 1), lambda bi, li: (0, 0)),
            ],
            out_specs=pl.BlockSpec((b_blk, c_out, l_tile),
                                   lambda bi, li: (bi, 0, li)),
        ),
        compiler_params=pltpu.CompilerParams(
            # Both axes independent; on v7x "parallel" grid axes are sharded
            # across the two TensorCores.
            dimension_semantics=("parallel", "parallel"),
            vmem_limit_bytes=int(vmem_limit),
        ),
    )(x3d, wt, b)


# ----------------------------------------------------------------------------
# Module
# ----------------------------------------------------------------------------
class GraphResidual:
    """JAX/Pallas port of shar.graphs.graphresidual.GraphResidual."""

    def __init__(self, in_channels: int, out_channels: int, stride: int,
                 key: jax.Array | None = None, l_tile: int = 8192,
                 min_pallas_bytes: int = 1 << 19) -> None:
        self.in_channels = in_channels
        self.out_channels = out_channels
        self.stride = stride
        self.l_tile = l_tile
        # Problems whose total activation+output traffic is below this many
        # bytes use a plain einsum (kernel-launch overhead would dominate).
        self.min_pallas_bytes = min_pallas_bytes
        self.identity = (in_channels == out_channels and stride == 1)

        if not self.identity:
            if key is None:
                key = jax.random.PRNGKey(0)
            kw, kb = jax.random.split(key)
            # PyTorch Conv2d default init: kaiming_uniform_(a=sqrt(5)) on the
            # weight and U(-1/sqrt(fan_in), 1/sqrt(fan_in)) on the bias, with
            # fan_in = in_channels for a 1x1 kernel -> both bounds 1/sqrt(fan_in).
            fan_in = in_channels
            bound = fan_in ** -0.5
            # weight (C_out, C_in, 1, 1) in PyTorch -> stored as (C_out, C_in)
            self.weight_t = jax.random.uniform(
                kw, (out_channels, in_channels), jnp.float32,
                minval=-bound, maxval=bound)
            # bias stored as a (C_out, 1) column for lane-broadcast in-kernel
            self.bias = jax.random.uniform(
                kb, (out_channels, 1), jnp.float32,
                minval=-bound, maxval=bound)

    def __call__(self, x: jax.Array) -> jax.Array:
        """x: (B, C_in, F, N) -> (B, C_out, F_out, N)."""
        if self.identity:
            return x

        B, C_in, F, N = x.shape
        assert C_in == self.in_channels

        if self.stride > 1:
            # Single strided-slice pass (kernel_size=1 conv, stride (s, 1)).
            # TODO(synk): replace with an in-kernel strided HBM DMA gather to
            # drop this extra read+write pass on the stride>1 path.
            x = x[:, :, ::self.stride, :]            # (B, C_in, F_out, N)
        F_out = x.shape[2]

        # Free, contiguous reshape -- no transpose anywhere.
        L = F_out * N
        x3 = x.reshape(B, C_in, L)                   # (B, C_in, L)

        itemsize = jnp.dtype(x3.dtype).itemsize
        total_bytes = (B * C_in * L + B * self.out_channels * L) * itemsize
        if total_bytes < self.min_pallas_bytes:
            # Tiny-problem fast path: launch/grid overhead would dominate.
            y3 = (jnp.einsum("bcl,oc->bol", x3,
                             self.weight_t.astype(x3.dtype),
                             preferred_element_type=jnp.float32)
                  + self.bias[None]).astype(x3.dtype)
        else:
            y3 = _pallas_pointwise_conv(x3, self.weight_t, self.bias,
                                        l_tile=self.l_tile)

        return y3.reshape(B, self.out_channels, F_out, N)


# ----------------------------------------------------------------------------
# Self-test
# ----------------------------------------------------------------------------
if __name__ == "__main__":
    key = jax.random.PRNGKey(0)
    kx, kp, kx2, kp2, kx3, kp3 = jax.random.split(key, 6)

    def ref_conv(x, mod, stride):
        xs = x[:, :, ::stride, :] if stride > 1 else x
        return jnp.einsum("bcfn,oc->bofn", xs, mod.weight_t) \
            + mod.bias[:, 0][None, :, None, None]

    # ---- Case 1: channel remap + temporal stride (force the Pallas path) ---
    B, C_in, F, N = 2, 4, 16, 8
    C_out, stride = 8, 2
    x = jax.random.normal(kx, (B, C_in, F, N), jnp.float32)

    mod = GraphResidual(C_in, C_out, stride, key=kp, min_pallas_bytes=0)
    y = jax.block_until_ready(mod(x))
    F_out = (F - 1) // stride + 1
    assert y.shape == (B, C_out, F_out, N), y.shape
    assert jnp.allclose(y, ref_conv(x, mod, stride), atol=1e-4, rtol=1e-4)

    # ---- Case 2: stride == 1 remap, multi-step ragged lane grid (Pallas) ---
    B2, C2_in, F2, N2 = 2, 8, 24, 25
    C2_out = 16
    x2 = jax.random.normal(kx2, (B2, C2_in, F2, N2), jnp.float32)

    # l_tile=256 forces grid_l = cdiv(600, 256) = 3 with a ragged tail block.
    mod2 = GraphResidual(C2_in, C2_out, 1, key=kp2, l_tile=256,
                         min_pallas_bytes=0)
    y2 = jax.block_until_ready(mod2(x2))
    assert y2.shape == (B2, C2_out, F2, N2), y2.shape
    assert jnp.allclose(y2, ref_conv(x2, mod2, 1), atol=1e-4, rtol=1e-4)

    # ---- Case 3: moderate size, default tiling/thresholds (Pallas path) ----
    B3, C3_in, F3, N3 = 4, 64, 64, 25
    C3_out, stride3 = 128, 2
    x3 = jax.random.normal(kx3, (B3, C3_in, F3, N3), jnp.float32)

    mod3 = GraphResidual(C3_in, C3_out, stride3, key=kp3)
    y3 = jax.block_until_ready(mod3(x3))
    F3_out = (F3 - 1) // stride3 + 1
    assert y3.shape == (B3, C3_out, F3_out, N3), y3.shape
    assert jnp.allclose(y3, ref_conv(x3, mod3, stride3), atol=1e-3, rtol=1e-3)

    # ---- Tiny-problem einsum fast path (default threshold) -----------------
    mod_fast = GraphResidual(C_in, C_out, stride, key=kp)
    y_fast = jax.block_until_ready(mod_fast(x))
    assert jnp.allclose(y_fast, ref_conv(x, mod_fast, stride),
                        atol=1e-4, rtol=1e-4)

    # ---- Identity branch (in == out, stride == 1): pure pass-through -------
    mod_id = GraphResidual(C_in, C_in, 1)
    y_id = jax.block_until_ready(mod_id(x))
    assert y_id.shape == x.shape and jnp.array_equal(y_id, x)

    print("KERNEL_OK")
</pallas_src>

<mosaic_0001>
module attributes {stable_mosaic.version = 11 : i64} {
  func.func @_residual_conv_kernel(%arg0: i32, %arg1: i32, %arg2: memref<2x4x64xf32, #tpu.memory_space<vmem>>, %arg3: memref<8x4xf32, #tpu.memory_space<vmem>>, %arg4: memref<8x1xf32, #tpu.memory_space<vmem>>, %arg5: memref<2x8x64xf32, #tpu.memory_space<vmem>>) attributes {dimension_semantics = [#tpu.dimension_semantics<parallel>, #tpu.dimension_semantics<parallel>], iteration_bounds = array<i64: 1, 1>, scalar_prefetch = 0 : i64, scratch_operands = 0 : i64, tpu.core_type = #tpu.core_type<tc>, window_params = [{transform_indices = @transform_0, window_bounds = array<i64: 2, 4, 64>}, {pipeline_mode = #tpu.pipeline_mode<synchronous>, transform_indices = @transform_1, window_bounds = array<i64: 8, 4>}, {pipeline_mode = #tpu.pipeline_mode<synchronous>, transform_indices = @transform_2, window_bounds = array<i64: 8, 1>}, {transform_indices = @transform_3, window_bounds = array<i64: 2, 8, 64>}]} {
    %c0 = arith.constant 0 : index
    %c0_0 = arith.constant 0 : index
    %0 = vector.load %arg3[%c0, %c0_0] : memref<8x4xf32, #tpu.memory_space<vmem>>, vector<8x4xf32>
    %c0_1 = arith.constant 0 : index
    %c0_2 = arith.constant 0 : index
    %1 = vector.load %arg4[%c0_1, %c0_2] : memref<8x1xf32, #tpu.memory_space<vmem>>, vector<8x1xf32>
    %c0_3 = arith.constant 0 : index
    %c0_4 = arith.constant 0 : index
    %c0_5 = arith.constant 0 : index
    %2 = vector.load %arg2[%c0_3, %c0_4, %c0_5] : memref<2x4x64xf32, #tpu.memory_space<vmem>>, vector<1x4x64xf32>
    %3 = vector.shape_cast %2 : vector<1x4x64xf32> to vector<4x64xf32>
    %cst = arith.constant dense<0.000000e+00> : vector<8x64xf32>
    %4 = tpu.matmul %0, %3, %cst {dimension_numbers = #tpu.dot_dimension_numbers<[1], [0], [0], [1], [0, 0, 1, 1], [], []>} : vector<8x4xf32>, vector<4x64xf32>, vector<8x64xf32> -> vector<8x64xf32>
    %5 = vector.broadcast %1 : vector<8x1xf32> to vector<8x64xf32>
    %6 = arith.addf %4, %5 : vector<8x64xf32>
    %c0_6 = arith.constant 0 : index
    %c0_7 = arith.constant 0 : index
    %c0_8 = arith.constant 0 : index
    %7 = vector.load %arg5[%c0_6, %c0_7, %c0_8] : memref<2x8x64xf32, #tpu.memory_space<vmem>>, vector<1x8x64xf32>
    %8 = vector.shape_cast %7 : vector<1x8x64xf32> to vector<8x64xf32>
    %9 = vector.shape_cast %6 : vector<8x64xf32> to vector<1x8x64xf32>
    tpu.vector_store %arg5[%c0_6, %c0_7, %c0_8], %9 {strides = array<i32>} : memref<2x8x64xf32, #tpu.memory_space<vmem>>, vector<1x8x64xf32>,
    %c1 = arith.constant 1 : index
    %c0_9 = arith.constant 0 : index
    %c0_10 = arith.constant 0 : index
    %10 = vector.load %arg2[%c1, %c0_9, %c0_10] : memref<2x4x64xf32, #tpu.memory_space<vmem>>, vector<1x4x64xf32>
    %11 = vector.shape_cast %10 : vector<1x4x64xf32> to vector<4x64xf32>
    %cst_11 = arith.constant dense<0.000000e+00> : vector<8x64xf32>
    %12 = tpu.matmul %0, %11, %cst_11 {dimension_numbers = #tpu.dot_dimension_numbers<[1], [0], [0], [1], [0, 0, 1, 1], [], []>} : vector<8x4xf32>, vector<4x64xf32>, vector<8x64xf32> -> vector<8x64xf32>
    %13 = vector.broadcast %1 : vector<8x1xf32> to vector<8x64xf32>
    %14 = arith.addf %12, %13 : vector<8x64xf32>
    %c1_12 = arith.constant 1 : index
    %c0_13 = arith.constant 0 : index
    %c0_14 = arith.constant 0 : index
    %15 = vector.load %arg5[%c1_12, %c0_13, %c0_14] : memref<2x8x64xf32, #tpu.memory_space<vmem>>, vector<1x8x64xf32>
    %16 = vector.shape_cast %15 : vector<1x8x64xf32> to vector<8x64xf32>
    %17 = vector.shape_cast %14 : vector<8x64xf32> to vector<1x8x64xf32>
    tpu.vector_store %arg5[%c1_12, %c0_13, %c0_14], %17 {strides = array<i32>} : memref<2x8x64xf32, #tpu.memory_space<vmem>>, vector<1x8x64xf32>,
    return
  }
  func.func @transform_0(%arg0: i32, %arg1: i32) -> (i32, i32, i32) {
    %c0_i32 = arith.constant 0 : i32
    %c0_i32_0 = arith.constant 0 : i32
    return %arg0, %c0_i32, %arg1 : i32, i32, i32
  }
  func.func @transform_1(%arg0: i32, %arg1: i32) -> (i32, i32) {
    %c0_i32 = arith.constant 0 : i32
    %c0_i32_0 = arith.constant 0 : i32
    %c0_i32_1 = arith.constant 0 : i32
    return %c0_i32, %c0_i32_0 : i32, i32
  }
  func.func @transform_2(%arg0: i32, %arg1: i32) -> (i32, i32) {
    %c0_i32 = arith.constant 0 : i32
    %c0_i32_0 = arith.constant 0 : i32
    %c0_i32_1 = arith.constant 0 : i32
    return %c0_i32, %c0_i32_0 : i32, i32
  }
  func.func @transform_3(%arg0: i32, %arg1: i32) -> (i32, i32, i32) {
    %c0_i32 = arith.constant 0 : i32
    %c0_i32_0 = arith.constant 0 : i32
    return %arg0, %c0_i32, %arg1 : i32, i32, i32
  }
}

</mosaic_0001>

<llo_original>
// kernel: tpu_custom_call.1
$region0: #{tpu_custom_call.1}
  #allocation0 [shape = 'u32[]', space=smem, size = 0x4, offset = 0x4, fixed_abs, tag = 'smem constant byte address 0x4 - core index']
  #allocation1 [shape = 'u32[144,128]{1,0:T(1,128)}', space=vmem, size = 0x12000, scoped, tag = 'internal scratch']
  %s0 = inlined_call_operand.vmem [shape: f32[2,4,64], index: 0, kind: input, shape index: {}]
  %s1 = inlined_call_operand.vmem [shape: f32[8,4], index: 1, kind: input, shape index: {}]
  %s2 = inlined_call_operand.vmem [shape: f32[8,1], index: 2, kind: input, shape index: {}]
  %s3 = inlined_call_operand.hbm [shape: f32[2,8,64], index: 3, kind: output, shape index: {}]
  %s4 = sld [smem:[#allocation0]]
  $region22: #{tpu_custom_call.1} parent=0
    _
  %s6 = ssub.s32 1, %s4
  %s7 = scalar_select 0, %s6, %s4
  $region1: #{tpu_custom_call.1} parent=0
    #allocation2 [shape = 'u8[8192]{0}', space=vmem, size = 0x2000, scoped, tag = 'output window, operand 0, single buffered']
    #allocation3 [shape = 's32[1]{0}', space=sflag, size = 0x4, scoped, tag = 'scoped memory for tpu_custom_call.1']
    %8 = vsyncpa [#allocation3], 0
    // Predicated region
    $region2: #{tpu_custom_call.1} parent=1 // pred_check
      _
    $region3: #{tpu_custom_call.1} parent=1 // pred_check_branch
      %10 = sbr.rel (0) target = $region5
    $region4: #{tpu_custom_call.1} parent=1 // pred_region
      _
    $region5: #{tpu_custom_call.1} parent=1 // pred_fallthru
      _
    // Predicated region
    $region6: #{tpu_custom_call.1} parent=1 // pred_check
      _
    $region7: #{tpu_custom_call.1} parent=1 // pred_check_branch
      %12 = sbr.rel (0) target = $region9
    $region8: #{tpu_custom_call.1} parent=1 // pred_region
      _
    $region9: #{tpu_custom_call.1} parent=1 // pred_fallthru
      _
    // Predicated region
    $region10: #{tpu_custom_call.1} parent=1 // pred_check
      _
    $region11: #{tpu_custom_call.1} parent=1 // pred_check_branch
      %14 = sbr.rel (0) target = $region13
    $region12: #{tpu_custom_call.1} parent=1 // pred_region
      _
    $region13: #{tpu_custom_call.1} parent=1 // pred_fallthru
      _
    %v15 = vld [vmem:[%s1] sm:$0xff]
    %v16 = vld [vmem:[%s2] sm:$0xff]
    %v17 = vld [vmem:[%s0] sm:$0xf]
    %19 = vset.pattern.permute.xlu0 0
    %20 = vperm.xlu0 %19, %v16
    %v21 = vpop.permute.xlu0 %20
    %vm23 = vcmask 31744
    %v25 = vsel %vm23, %v15, 0
    %vm27 = vcmask 1043456
    %v29 = vsel %vm27, %v17, 0
    %31 = vmatprep.subr.mxu0 0.0
    %32 = vmatpush1.msra.mxu0 0.0
    %33 = vmatprep.subr.mxu0 0.0
    %34 = vmatpush1.msra.mxu0 0.0
    %35 = vmatprep.subr.mxu0 0.0
    %36 = vmatpush1.msra.mxu0 0.0
    %37 = vmatprep.subr.mxu0 0.0
    %38 = vmatpush1.msra.mxu0 0.0
    %39 = vmatprep.subr.mxu0 0.0
    %40 = vmatpush1.msra.mxu0 0.0
    %41 = vmatprep.subr.mxu0 0.0
    %42 = vmatpush1.msra.mxu0 0.0
    %43 = vmatprep.subr.mxu0 0.0
    %44 = vmatpush1.msra.mxu0 0.0
    %45 = vmatprep.subr.mxu0 0.0
    %46 = vmatpush1.msra.mxu0 0.0
    %47 = vmatprep.subr.mxu0 0.0
    %48 = vmatpush1.msra.mxu0 0.0
    %49 = vmatprep.subr.mxu0 0.0
    %50 = vmatpush1.msra.mxu0 0.0
    %51 = vmatprep.subr.mxu0 0.0
    %52 = vmatpush1.msra.mxu0 0.0
    %53 = vmatprep.subr.mxu0 0.0
    %54 = vmatpush1.msra.mxu0 0.0
    %55 = vmatprep.subr.mxu0 0.0
    %56 = vmatpush1.msra.mxu0 0.0
    %57 = vmatprep.subr.mxu0 0.0
    %58 = vmatpush1.msra.mxu0 0.0
    %59 = vmatprep.subr.mxu0 0.0
    %60 = vmatpush1.msra.mxu0 0.0
    %61 = vmatprep.subr.mxu0 0.0
    %62 = vmatpush1.msra.mxu0 %v29
    %63 = vmatprep.subr.mxu0 0.0
    %64 = vmatpush2.msra.mxu0 0.0
    %65 = vmatprep.subr.mxu0 0.0
    %66 = vmatpush2.msra.mxu0 0.0
    %67 = vmatprep.subr.mxu0 0.0
    %68 = vmatpush2.msra.mxu0 0.0
    %69 = vmatprep.subr.mxu0 0.0
    %70 = vmatpush2.msra.mxu0 0.0
    %71 = vmatprep.subr.mxu0 0.0
    %72 = vmatpush2.msra.mxu0 0.0
    %73 = vmatprep.subr.mxu0 0.0
    %74 = vmatpush2.msra.mxu0 0.0
    %75 = vmatprep.subr.mxu0 0.0
    %76 = vmatpush2.msra.mxu0 0.0
    %77 = vmatprep.subr.mxu0 0.0
    %78 = vmatpush2.msra.mxu0 0.0
    %79 = vmatprep.subr.mxu0 0.0
    %80 = vmatpush2.msra.mxu0 0.0
    %81 = vmatprep.subr.mxu0 0.0
    %82 = vmatpush2.msra.mxu0 0.0
    %83 = vmatprep.subr.mxu0 0.0
    %84 = vmatpush2.msra.mxu0 0.0
    %85 = vmatprep.subr.mxu0 0.0
    %86 = vmatpush2.msra.mxu0 0.0
    %87 = vmatprep.subr.mxu0 0.0
    %88 = vmatpush2.msra.mxu0 0.0
    %89 = vmatprep.subr.mxu0 0.0
    %90 = vmatpush2.msra.mxu0 0.0
    %91 = vmatprep.subr.mxu0 0.0
    %92 = vmatpush2.msra.mxu0 0.0
    %93 = vmatprep.subr.mxu0 0.0
    %94 = vmatpush2.msra.mxu0 0.0
    %95 = vmatprep.mubr.f32.mxu0 0.0
    %96 = vmatmul.mubr.f32.gmra.mxu0 %v25
    %v97 = vpop.f32.mrf.mxu0
    %v98 = vadd.f32 %v21, %v97
    %v99 = vpop.f32.mrf.mxu0
    %100 = vdwg.mxu0
    %vm101 = vcmask 523264
    %102 = vst.msk [vmem:[#allocation2] sm:$0xff] %vm101, %v98
    %s103 = scalar_lea.vmem %s0, 4
    %v104 = vld [vmem:[%s103] sm:$0xf]
    %v106 = vsel %vm27, %v104, 0
    %108 = vmatprep.subr.mxu0 0.0
    %109 = vmatpush1.msra.mxu0 0.0
    %110 = vmatprep.subr.mxu0 0.0
    %111 = vmatpush1.msra.mxu0 0.0
    %112 = vmatprep.subr.mxu0 0.0
    %113 = vmatpush1.msra.mxu0 0.0
    %114 = vmatprep.subr.mxu0 0.0
    %115 = vmatpush1.msra.mxu0 0.0
    %116 = vmatprep.subr.mxu0 0.0
    %117 = vmatpush1.msra.mxu0 0.0
    %118 = vmatprep.subr.mxu0 0.0
    %119 = vmatpush1.msra.mxu0 0.0
    %120 = vmatprep.subr.mxu0 0.0
    %121 = vmatpush1.msra.mxu0 0.0
    %122 = vmatprep.subr.mxu0 0.0
    %123 = vmatpush1.msra.mxu0 0.0
    %124 = vmatprep.subr.mxu0 0.0
    %125 = vmatpush1.msra.mxu0 0.0
    %126 = vmatprep.subr.mxu0 0.0
    %127 = vmatpush1.msra.mxu0 0.0
    %128 = vmatprep.subr.mxu0 0.0
    %129 = vmatpush1.msra.mxu0 0.0
    %130 = vmatprep.subr.mxu0 0.0
    %131 = vmatpush1.msra.mxu0 0.0
    %132 = vmatprep.subr.mxu0 0.0
    %133 = vmatpush1.msra.mxu0 0.0
    %134 = vmatprep.subr.mxu0 0.0
    %135 = vmatpush1.msra.mxu0 0.0
    %136 = vmatprep.subr.mxu0 0.0
    %137 = vmatpush1.msra.mxu0 0.0
    %138 = vmatprep.subr.mxu0 0.0
    %139 = vmatpush1.msra.mxu0 %v106
    %140 = vmatprep.subr.mxu0 0.0
    %141 = vmatpush2.msra.mxu0 0.0
    %142 = vmatprep.subr.mxu0 0.0
    %143 = vmatpush2.msra.mxu0 0.0
    %144 = vmatprep.subr.mxu0 0.0
    %145 = vmatpush2.msra.mxu0 0.0
    %146 = vmatprep.subr.mxu0 0.0
    %147 = vmatpush2.msra.mxu0 0.0
    %148 = vmatprep.subr.mxu0 0.0
    %149 = vmatpush2.msra.mxu0 0.0
    %150 = vmatprep.subr.mxu0 0.0
    %151 = vmatpush2.msra.mxu0 0.0
    %152 = vmatprep.subr.mxu0 0.0
    %153 = vmatpush2.msra.mxu0 0.0
    %154 = vmatprep.subr.mxu0 0.0
    %155 = vmatpush2.msra.mxu0 0.0
    %156 = vmatprep.subr.mxu0 0.0
    %157 = vmatpush2.msra.mxu0 0.0
    %158 = vmatprep.subr.mxu0 0.0
    %159 = vmatpush2.msra.mxu0 0.0
    %160 = vmatprep.subr.mxu0 0.0
    %161 = vmatpush2.msra.mxu0 0.0
    %162 = vmatprep.subr.mxu0 0.0
    %163 = vmatpush2.msra.mxu0 0.0
    %164 = vmatprep.subr.mxu0 0.0
    %165 = vmatpush2.msra.mxu0 0.0
    %166 = vmatprep.subr.mxu0 0.0
    %167 = vmatpush2.msra.mxu0 0.0
    %168 = vmatprep.subr.mxu0 0.0
    %169 = vmatpush2.msra.mxu0 0.0
    %170 = vmatprep.subr.mxu0 0.0
    %171 = vmatpush2.msra.mxu0 0.0
    %172 = vmatprep.mubr.f32.mxu0 0.0
    %173 = vmatmul.mubr.f32.gmra.mxu0 %v25
    %v174 = vpop.f32.mrf.mxu0
    %v175 = vadd.f32 %v21, %v174
    %v176 = vpop.f32.mrf.mxu0
    %177 = vdwg.mxu0
    %s178 = scalar_lea.vmem [#allocation2], 8
    %179 = vst.msk [vmem:[%s178] sm:$0xff] %vm101, %v175
    // Predicated region
    $region14: #{tpu_custom_call.1} parent=1 // pred_check
      _
    $region15: #{tpu_custom_call.1} parent=1 // pred_check_branch
      %181 = sbr.rel (0) target = $region17
    $region16: #{tpu_custom_call.1} parent=1 // pred_region
      %s183 = ssub.s32 256, 256
      %184 = vsyncadd [#allocation3], %s183
      %s185 = sshll.u32 [#allocation2], 4
      %s186 = int_to_ptr.vmem [resolvable:$true] %s185
      %191 = dma.vmem_to_hbm [thread:$0]  %s186, 256, %s3, [#allocation3], 128, 128, 8
    $region17: #{tpu_custom_call.1} parent=1 // pred_fallthru
      _
    // Predicated region
    $region18: #{tpu_custom_call.1} parent=1 // pred_check
      _
    $region19: #{tpu_custom_call.1} parent=1 // pred_check_branch
      %193 = sbr.rel (0) target = $region21
    $region20: #{tpu_custom_call.1} parent=1 // pred_region
      %194 = dma.done [#allocation3], 256
    $region21: #{tpu_custom_call.1} parent=1 // pred_fallthru
      _
    %195 = vsyncpa [#allocation3], 1

</llo_original>
